<compile_context>
chip_gen: v7x
topology: tpu7x:2x2x1
jax: 0.10.0
libtpu: 0.0.40
codegen_flags: <defaults>
</compile_context>

<pallas_src>
import functools

import jax
import jax.numpy as jnp
from jax.experimental import pallas as pl
from jax.experimental.pallas import tpu as pltpu


# ---------------------------------------------------------------------------
# helpers
# ---------------------------------------------------------------------------
def _round_up(x, m):
    return (x + m - 1) // m * m


def _pad2(a, rows, cols):
    r, c = a.shape
    if r == rows and c == cols:
        return a
    return jnp.pad(a, ((0, rows - r), (0, cols - c)))


def _pick_tm(n, max_tm=256):
    # Largest row tile <= max_tm, multiple of 8 (f32 sublane granularity).
    return min(max_tm, _round_up(n, 8))


def _resident(shape):
    # Weight/bias blocks: same block for every grid step (stay in VMEM).
    return pl.BlockSpec(shape, lambda i: (0, 0))


_VMEM_LIMIT = 48 * 1024 * 1024  # headroom under v7x 64 MiB, fine on v5e/v6e


# ---------------------------------------------------------------------------
# Kernel 1: fused start/end projection.  Reads one x tile, runs both
#   Linear -> ReLU -> Linear chains, writes two outputs.
# ---------------------------------------------------------------------------
def _dual_proj_kernel(x_ref, w1s_ref, b1s_ref, w2s_ref, b2s_ref,
                      w1e_ref, b1e_ref, w2e_ref, b2e_ref,
                      os_ref, oe_ref):
    xb = x_ref[...].astype(jnp.bfloat16)

    hs = jnp.dot(xb, w1s_ref[...], preferred_element_type=jnp.float32) + b1s_ref[...]
    hs = jnp.maximum(hs, 0.0).astype(jnp.bfloat16)
    ys = jnp.dot(hs, w2s_ref[...], preferred_element_type=jnp.float32) + b2s_ref[...]
    os_ref[...] = ys.astype(os_ref.dtype)

    he = jnp.dot(xb, w1e_ref[...], preferred_element_type=jnp.float32) + b1e_ref[...]
    he = jnp.maximum(he, 0.0).astype(jnp.bfloat16)
    ye = jnp.dot(he, w2e_ref[...], preferred_element_type=jnp.float32) + b2e_ref[...]
    oe_ref[...] = ye.astype(oe_ref.dtype)


def dual_projection_pallas(x, start_params, end_params, *, max_tm=256):
    """x: (N, Din) f32.  Returns (start (N, Dout), end (N, Dout))."""
    N, Din = x.shape
    w1s, b1s, w2s, b2s = start_params
    w1e, b1e, w2e, b2e = end_params
    H, Dout = w1s.shape[1], w2s.shape[1]

    Din_p = _round_up(Din, 128)
    H_p = _round_up(H, 128)
    Dout_p = _round_up(Dout, 128)
    tm = _pick_tm(N, max_tm)
    N_p = _round_up(N, tm)

    bf = jnp.bfloat16
    x_p = _pad2(x, N_p, Din_p)
    w1s_p = _pad2(w1s, Din_p, H_p).astype(bf)
    w2s_p = _pad2(w2s, H_p, Dout_p).astype(bf)
    w1e_p = _pad2(w1e, Din_p, H_p).astype(bf)
    w2e_p = _pad2(w2e, H_p, Dout_p).astype(bf)
    b1s_p = _pad2(b1s, 1, H_p)
    b2s_p = _pad2(b2s, 1, Dout_p)
    b1e_p = _pad2(b1e, 1, H_p)
    b2e_p = _pad2(b2e, 1, Dout_p)

    out_s, out_e = pl.pallas_call(
        _dual_proj_kernel,
        out_shape=(jax.ShapeDtypeStruct((N_p, Dout_p), x.dtype),
                   jax.ShapeDtypeStruct((N_p, Dout_p), x.dtype)),
        grid_spec=pltpu.PrefetchScalarGridSpec(
            num_scalar_prefetch=0,
            grid=(N_p // tm,),
            in_specs=[
                pl.BlockSpec((tm, Din_p), lambda i: (i, 0)),   # activations
                _resident((Din_p, H_p)), _resident((1, H_p)),  # start W1/b1
                _resident((H_p, Dout_p)), _resident((1, Dout_p)),
                _resident((Din_p, H_p)), _resident((1, H_p)),  # end W1/b1
                _resident((H_p, Dout_p)), _resident((1, Dout_p)),
            ],
            out_specs=(pl.BlockSpec((tm, Dout_p), lambda i: (i, 0)),
                       pl.BlockSpec((tm, Dout_p), lambda i: (i, 0))),
        ),
        compiler_params=pltpu.CompilerParams(
            dimension_semantics=("parallel",),
            vmem_limit_bytes=_VMEM_LIMIT),
    )(x_p, w1s_p, b1s_p, w2s_p, b2s_p, w1e_p, b1e_p, w2e_p, b2e_p)
    return out_s[:N, :Dout], out_e[:N, :Dout]


# ---------------------------------------------------------------------------
# Kernel 2: out-projection with the concat eliminated and pre-ReLU fused:
#   relu(cat(s, e)) @ W1 == relu(s) @ W1[:D] + relu(e) @ W1[D:]
# ---------------------------------------------------------------------------
def _out_proj_kernel(xs_ref, xe_ref, w1a_ref, w1b_ref, b1_ref, w2_ref, b2_ref,
                     o_ref):
    xs = jnp.maximum(xs_ref[...], 0.0).astype(jnp.bfloat16)
    xe = jnp.maximum(xe_ref[...], 0.0).astype(jnp.bfloat16)
    h = (jnp.dot(xs, w1a_ref[...], preferred_element_type=jnp.float32)
         + jnp.dot(xe, w1b_ref[...], preferred_element_type=jnp.float32)
         + b1_ref[...])
    h = jnp.maximum(h, 0.0).astype(jnp.bfloat16)
    y = jnp.dot(h, w2_ref[...], preferred_element_type=jnp.float32) + b2_ref[...]
    o_ref[...] = y.astype(o_ref.dtype)


def out_projection_pallas(xs, xe, out_params, *, max_tm=256):
    """xs, xe: (N, D) f32 (pre-ReLU).  Returns (N, Dout)."""
    N, D = xs.shape
    w1, b1, w2, b2 = out_params          # w1: (2D, H2), w2: (H2, Dout)
    H2, Dout = w1.shape[1], w2.shape[1]
    w1a, w1b = w1[:D], w1[D:]

    D_p = _round_up(D, 128)
    H_p = _round_up(H2, 128)
    Dout_p = _round_up(Dout, 128)
    tm = _pick_tm(N, max_tm)
    N_p = _round_up(N, tm)

    bf = jnp.bfloat16
    xs_p = _pad2(xs, N_p, D_p)
    xe_p = _pad2(xe, N_p, D_p)
    w1a_p = _pad2(w1a, D_p, H_p).astype(bf)
    w1b_p = _pad2(w1b, D_p, H_p).astype(bf)
    w2_p = _pad2(w2, H_p, Dout_p).astype(bf)
    b1_p = _pad2(b1, 1, H_p)
    b2_p = _pad2(b2, 1, Dout_p)

    out = pl.pallas_call(
        _out_proj_kernel,
        out_shape=jax.ShapeDtypeStruct((N_p, Dout_p), xs.dtype),
        grid_spec=pltpu.PrefetchScalarGridSpec(
            num_scalar_prefetch=0,
            grid=(N_p // tm,),
            in_specs=[
                pl.BlockSpec((tm, D_p), lambda i: (i, 0)),   # start span rows
                pl.BlockSpec((tm, D_p), lambda i: (i, 0)),   # end span rows
                _resident((D_p, H_p)), _resident((D_p, H_p)),
                _resident((1, H_p)),
                _resident((H_p, Dout_p)), _resident((1, Dout_p)),
            ],
            out_specs=pl.BlockSpec((tm, Dout_p), lambda i: (i, 0)),
        ),
        compiler_params=pltpu.CompilerParams(
            dimension_semantics=("parallel",),
            vmem_limit_bytes=_VMEM_LIMIT),
    )(xs_p, xe_p, w1a_p, w1b_p, b1_p, w2_p, b2_p)
    return out[:N, :Dout]


# ---------------------------------------------------------------------------
# Parameter construction (deterministic, synthetic — mirrors __init__ shapes)
# ---------------------------------------------------------------------------
def _make_linear(key, in_dim, out_dim, dtype=jnp.float32):
    kw, kb = jax.random.split(key)
    # PyTorch Linear weight shape is (out, in); transpose for x @ W layout.
    w = jax.random.normal(kw, (out_dim, in_dim), dtype) * 0.02
    b = jax.random.normal(kb, (out_dim,), dtype) * 0.02
    return w.T, b.reshape(1, out_dim)


def make_projection_params(key, hidden_size, out_dim=None):
    if out_dim is None:
        out_dim = hidden_size
    mid = int(out_dim * 3 / 2)
    k1, k2 = jax.random.split(key)
    w1, b1 = _make_linear(k1, hidden_size, mid)
    w2, b2 = _make_linear(k2, mid, out_dim)
    return (w1, b1, w2, b2)


def make_span_marker_params(key, hidden_size):
    ks, ke, ko = jax.random.split(key, 3)
    return {
        "start": make_projection_params(ks, hidden_size),
        "end": make_projection_params(ke, hidden_size),
        "out": make_projection_params(ko, hidden_size * 2, out_dim=hidden_size),
    }


# ---------------------------------------------------------------------------
# Forward pass (gather/reshape glue in plain JAX, matmuls in Pallas)
# ---------------------------------------------------------------------------
def extract_elements(sequence, indices):
    # sequence: (B, L, D), indices: (B, K) -> (B, K, D)
    return jnp.take_along_axis(sequence, indices[:, :, None], axis=1)


def span_marker_v0_forward(params, h, span_idx, max_width):
    B, L, D = h.shape
    K = span_idx.shape[1]
    assert K == L * max_width, (K, L, max_width)  # required by final reshape
    h_flat = h.reshape(B * L, D)

    start_flat, end_flat = dual_projection_pallas(
        h_flat, params["start"], params["end"])
    start_rep = start_flat.reshape(B, L, D)
    end_rep = end_flat.reshape(B, L, D)

    # TODO(synk): span-endpoint gather kept in plain JAX; fusing it via scalar
    # prefetch would force per-row blocks and defeat the large row tiles.
    start_span = extract_elements(start_rep, span_idx[:, :, 0]).reshape(B * K, D)
    end_span = extract_elements(end_rep, span_idx[:, :, 1]).reshape(B * K, D)

    out = out_projection_pallas(start_span, end_span, params["out"])
    return out.reshape(B, L, max_width, D)


# ---------------------------------------------------------------------------
# Pure-JAX f32 reference for a sanity check
# ---------------------------------------------------------------------------
def _mlp_ref(x, w1, b1, w2, b2, pre_relu=False):
    if pre_relu:
        x = jnp.maximum(x, 0.0)
    h = jnp.maximum(x @ w1 + b1, 0.0)
    return h @ w2 + b2


def span_marker_v0_ref(params, h, span_idx, max_width):
    B, L, D = h.shape
    K = span_idx.shape[1]
    start_rep = _mlp_ref(h.reshape(B * L, D), *params["start"]).reshape(B, L, D)
    end_rep = _mlp_ref(h.reshape(B * L, D), *params["end"]).reshape(B, L, D)
    s = extract_elements(start_rep, span_idx[:, :, 0])
    e = extract_elements(end_rep, span_idx[:, :, 1])
    cat = jnp.concatenate([s, e], axis=-1).reshape(B * K, 2 * D)
    out = _mlp_ref(cat, *params["out"], pre_relu=True)
    return out.reshape(B, L, max_width, D)


if __name__ == "__main__":
    B, L, D, MAX_WIDTH = 2, 8, 32, 4
    K = L * MAX_WIDTH  # span_idx length so output reshapes to (B, L, max_width, D)

    key = jax.random.PRNGKey(0)
    k_h, k_idx, k_params = jax.random.split(key, 3)

    h = jax.random.normal(k_h, (B, L, D), jnp.float32)
    # span_idx[b, k] = (start_token, end_token), both in [0, L)
    starts = jnp.repeat(jnp.arange(L), MAX_WIDTH)                       # (K,)
    ends = jnp.minimum(starts + jnp.tile(jnp.arange(MAX_WIDTH), L), L - 1)
    span_idx = jnp.broadcast_to(
        jnp.stack([starts, ends], axis=-1)[None], (B, K, 2)
    ).astype(jnp.int32)

    params = make_span_marker_params(k_params, D)

    out = span_marker_v0_forward(params, h, span_idx, MAX_WIDTH)
    out = jax.block_until_ready(out)

    ref = span_marker_v0_ref(params, h, span_idx, MAX_WIDTH)
    assert out.shape == (B, L, MAX_WIDTH, D), out.shape
    # bf16 matmul inputs w/ f32 accumulation -> loosened tolerance vs f32 ref.
    assert jnp.allclose(out, ref, atol=1e-2, rtol=1e-2), "mismatch vs reference"

    print("KERNEL_OK")
</pallas_src>

<mosaic_0001>
module attributes {stable_mosaic.version = 11 : i64} {
  func.func @_dual_proj_kernel(%arg0: i32, %arg1: memref<16x128xf32, #tpu.memory_space<vmem>>, %arg2: memref<128x128xbf16, #tpu.memory_space<vmem>>, %arg3: memref<1x128xf32, #tpu.memory_space<vmem>>, %arg4: memref<128x128xbf16, #tpu.memory_space<vmem>>, %arg5: memref<1x128xf32, #tpu.memory_space<vmem>>, %arg6: memref<128x128xbf16, #tpu.memory_space<vmem>>, %arg7: memref<1x128xf32, #tpu.memory_space<vmem>>, %arg8: memref<128x128xbf16, #tpu.memory_space<vmem>>, %arg9: memref<1x128xf32, #tpu.memory_space<vmem>>, %arg10: memref<16x128xf32, #tpu.memory_space<vmem>>, %arg11: memref<16x128xf32, #tpu.memory_space<vmem>>) attributes {dimension_semantics = [#tpu.dimension_semantics<parallel>], iteration_bounds = array<i64: 1>, scalar_prefetch = 0 : i64, scratch_operands = 0 : i64, tpu.core_type = #tpu.core_type<tc>, window_params = [{transform_indices = @transform_0, window_bounds = array<i64: 16, 128>}, {pipeline_mode = #tpu.pipeline_mode<synchronous>, transform_indices = @transform_1, window_bounds = array<i64: 128, 128>}, {pipeline_mode = #tpu.pipeline_mode<synchronous>, transform_indices = @transform_2, window_bounds = array<i64: 1, 128>}, {pipeline_mode = #tpu.pipeline_mode<synchronous>, transform_indices = @transform_3, window_bounds = array<i64: 128, 128>}, {pipeline_mode = #tpu.pipeline_mode<synchronous>, transform_indices = @transform_4, window_bounds = array<i64: 1, 128>}, {pipeline_mode = #tpu.pipeline_mode<synchronous>, transform_indices = @transform_5, window_bounds = array<i64: 128, 128>}, {pipeline_mode = #tpu.pipeline_mode<synchronous>, transform_indices = @transform_6, window_bounds = array<i64: 1, 128>}, {pipeline_mode = #tpu.pipeline_mode<synchronous>, transform_indices = @transform_7, window_bounds = array<i64: 128, 128>}, {pipeline_mode = #tpu.pipeline_mode<synchronous>, transform_indices = @transform_8, window_bounds = array<i64: 1, 128>}, {transform_indices = @transform_9, window_bounds = array<i64: 16, 128>}, {transform_indices = @transform_10, window_bounds = array<i64: 16, 128>}]} {
    %c0 = arith.constant 0 : index
    %c0_0 = arith.constant 0 : index
    %0 = vector.load %arg1[%c0, %c0_0] : memref<16x128xf32, #tpu.memory_space<vmem>>, vector<16x128xf32>
    %1 = arith.truncf %0 : vector<16x128xf32> to vector<16x128xbf16>
    %c0_1 = arith.constant 0 : index
    %c0_2 = arith.constant 0 : index
    %2 = vector.load %arg2[%c0_1, %c0_2] : memref<128x128xbf16, #tpu.memory_space<vmem>>, vector<128x128xbf16>
    %cst = arith.constant dense<0.000000e+00> : vector<16x128xf32>
    %3 = tpu.matmul %1, %2, %cst {dimension_numbers = #tpu.dot_dimension_numbers<[1], [0], [0], [1], [0, 0, 1, 1], [], []>} : vector<16x128xbf16>, vector<128x128xbf16>, vector<16x128xf32> -> vector<16x128xf32>
    %c0_3 = arith.constant 0 : index
    %c0_4 = arith.constant 0 : index
    %4 = vector.load %arg3[%c0_3, %c0_4] : memref<1x128xf32, #tpu.memory_space<vmem>>, vector<1x128xf32>
    %5 = vector.broadcast %4 : vector<1x128xf32> to vector<16x128xf32>
    %6 = arith.addf %3, %5 : vector<16x128xf32>
    %cst_5 = arith.constant 0.000000e+00 : f32
    %7 = vector.broadcast %cst_5 : f32 to vector<16x128xf32>
    %8 = arith.maximumf %6, %7 : vector<16x128xf32>
    %9 = arith.truncf %8 : vector<16x128xf32> to vector<16x128xbf16>
    %c0_6 = arith.constant 0 : index
    %c0_7 = arith.constant 0 : index
    %10 = vector.load %arg4[%c0_6, %c0_7] : memref<128x128xbf16, #tpu.memory_space<vmem>>, vector<128x128xbf16>
    %cst_8 = arith.constant dense<0.000000e+00> : vector<16x128xf32>
    %11 = tpu.matmul %9, %10, %cst_8 {dimension_numbers = #tpu.dot_dimension_numbers<[1], [0], [0], [1], [0, 0, 1, 1], [], []>} : vector<16x128xbf16>, vector<128x128xbf16>, vector<16x128xf32> -> vector<16x128xf32>
    %c0_9 = arith.constant 0 : index
    %c0_10 = arith.constant 0 : index
    %12 = vector.load %arg5[%c0_9, %c0_10] : memref<1x128xf32, #tpu.memory_space<vmem>>, vector<1x128xf32>
    %13 = vector.broadcast %12 : vector<1x128xf32> to vector<16x128xf32>
    %14 = arith.addf %11, %13 : vector<16x128xf32>
    %c0_11 = arith.constant 0 : index
    %c0_12 = arith.constant 0 : index
    %15 = vector.load %arg10[%c0_11, %c0_12] : memref<16x128xf32, #tpu.memory_space<vmem>>, vector<16x128xf32>
    tpu.vector_store %arg10[%c0_11, %c0_12], %14 {strides = array<i32>} : memref<16x128xf32, #tpu.memory_space<vmem>>, vector<16x128xf32>,
    %c0_13 = arith.constant 0 : index
    %c0_14 = arith.constant 0 : index
    %16 = vector.load %arg6[%c0_13, %c0_14] : memref<128x128xbf16, #tpu.memory_space<vmem>>, vector<128x128xbf16>
    %cst_15 = arith.constant dense<0.000000e+00> : vector<16x128xf32>
    %17 = tpu.matmul %1, %16, %cst_15 {dimension_numbers = #tpu.dot_dimension_numbers<[1], [0], [0], [1], [0, 0, 1, 1], [], []>} : vector<16x128xbf16>, vector<128x128xbf16>, vector<16x128xf32> -> vector<16x128xf32>
    %c0_16 = arith.constant 0 : index
    %c0_17 = arith.constant 0 : index
    %18 = vector.load %arg7[%c0_16, %c0_17] : memref<1x128xf32, #tpu.memory_space<vmem>>, vector<1x128xf32>
    %19 = vector.broadcast %18 : vector<1x128xf32> to vector<16x128xf32>
    %20 = arith.addf %17, %19 : vector<16x128xf32>
    %cst_18 = arith.constant 0.000000e+00 : f32
    %21 = vector.broadcast %cst_18 : f32 to vector<16x128xf32>
    %22 = arith.maximumf %20, %21 : vector<16x128xf32>
    %23 = arith.truncf %22 : vector<16x128xf32> to vector<16x128xbf16>
    %c0_19 = arith.constant 0 : index
    %c0_20 = arith.constant 0 : index
    %24 = vector.load %arg8[%c0_19, %c0_20] : memref<128x128xbf16, #tpu.memory_space<vmem>>, vector<128x128xbf16>
    %cst_21 = arith.constant dense<0.000000e+00> : vector<16x128xf32>
    %25 = tpu.matmul %23, %24, %cst_21 {dimension_numbers = #tpu.dot_dimension_numbers<[1], [0], [0], [1], [0, 0, 1, 1], [], []>} : vector<16x128xbf16>, vector<128x128xbf16>, vector<16x128xf32> -> vector<16x128xf32>
    %c0_22 = arith.constant 0 : index
    %c0_23 = arith.constant 0 : index
    %26 = vector.load %arg9[%c0_22, %c0_23] : memref<1x128xf32, #tpu.memory_space<vmem>>, vector<1x128xf32>
    %27 = vector.broadcast %26 : vector<1x128xf32> to vector<16x128xf32>
    %28 = arith.addf %25, %27 : vector<16x128xf32>
    %c0_24 = arith.constant 0 : index
    %c0_25 = arith.constant 0 : index
    %29 = vector.load %arg11[%c0_24, %c0_25] : memref<16x128xf32, #tpu.memory_space<vmem>>, vector<16x128xf32>
    tpu.vector_store %arg11[%c0_24, %c0_25], %28 {strides = array<i32>} : memref<16x128xf32, #tpu.memory_space<vmem>>, vector<16x128xf32>,
    return
  }
  func.func @transform_0(%arg0: i32) -> (i32, i32) {
    %c0_i32 = arith.constant 0 : i32
    %c0_i32_0 = arith.constant 0 : i32
    return %arg0, %c0_i32 : i32, i32
  }
  func.func @transform_1(%arg0: i32) -> (i32, i32) {
    %c0_i32 = arith.constant 0 : i32
    %c0_i32_0 = arith.constant 0 : i32
    %c0_i32_1 = arith.constant 0 : i32
    return %c0_i32, %c0_i32_0 : i32, i32
  }
  func.func @transform_2(%arg0: i32) -> (i32, i32) {
    %c0_i32 = arith.constant 0 : i32
    %c0_i32_0 = arith.constant 0 : i32
    %c0_i32_1 = arith.constant 0 : i32
    return %c0_i32, %c0_i32_0 : i32, i32
  }
  func.func @transform_3(%arg0: i32) -> (i32, i32) {
    %c0_i32 = arith.constant 0 : i32
    %c0_i32_0 = arith.constant 0 : i32
    %c0_i32_1 = arith.constant 0 : i32
    return %c0_i32, %c0_i32_0 : i32, i32
  }
  func.func @transform_4(%arg0: i32) -> (i32, i32) {
    %c0_i32 = arith.constant 0 : i32
    %c0_i32_0 = arith.constant 0 : i32
    %c0_i32_1 = arith.constant 0 : i32
    return %c0_i32, %c0_i32_0 : i32, i32
  }
  func.func @transform_5(%arg0: i32) -> (i32, i32) {
    %c0_i32 = arith.constant 0 : i32
    %c0_i32_0 = arith.constant 0 : i32
    %c0_i32_1 = arith.constant 0 : i32
    return %c0_i32, %c0_i32_0 : i32, i32
  }
  func.func @transform_6(%arg0: i32) -> (i32, i32) {
    %c0_i32 = arith.constant 0 : i32
    %c0_i32_0 = arith.constant 0 : i32
    %c0_i32_1 = arith.constant 0 : i32
    return %c0_i32, %c0_i32_0 : i32, i32
  }
  func.func @transform_7(%arg0: i32) -> (i32, i32) {
    %c0_i32 = arith.constant 0 : i32
    %c0_i32_0 = arith.constant 0 : i32
    %c0_i32_1 = arith.constant 0 : i32
    return %c0_i32, %c0_i32_0 : i32, i32
  }
  func.func @transform_8(%arg0: i32) -> (i32, i32) {
    %c0_i32 = arith.constant 0 : i32
    %c0_i32_0 = arith.constant 0 : i32
    %c0_i32_1 = arith.constant 0 : i32
    return %c0_i32, %c0_i32_0 : i32, i32
  }
  func.func @transform_9(%arg0: i32) -> (i32, i32) {
    %c0_i32 = arith.constant 0 : i32
    %c0_i32_0 = arith.constant 0 : i32
    return %arg0, %c0_i32 : i32, i32
  }
  func.func @transform_10(%arg0: i32) -> (i32, i32) {
    %c0_i32 = arith.constant 0 : i32
    %c0_i32_0 = arith.constant 0 : i32
    return %arg0, %c0_i32 : i32, i32
  }
}

</mosaic_0001>

<llo_original>
// kernel: tpu_custom_call.1
$region0: #{tpu_custom_call.1}
  #allocation0 [shape = 'u32[]', space=smem, size = 0x4, offset = 0x4, fixed_abs, tag = 'smem constant byte address 0x4 - core index']
  #allocation1 [shape = 'u32[144,128]{1,0:T(1,128)}', space=vmem, size = 0x12000, scoped, tag = 'internal scratch']
  %s0 = inlined_call_operand.hbm [shape: f32[16,128], index: 0, kind: input, shape index: {}]
  %s1 = inlined_call_operand.hbm [shape: bf16[128,128], index: 1, kind: input, shape index: {}]
  %s2 = inlined_call_operand.vmem [shape: f32[1,128], index: 2, kind: input, shape index: {}]
  %s3 = inlined_call_operand.hbm [shape: bf16[128,128], index: 3, kind: input, shape index: {}]
  %s4 = inlined_call_operand.vmem [shape: f32[1,128], index: 4, kind: input, shape index: {}]
  %s5 = inlined_call_operand.hbm [shape: bf16[128,128], index: 5, kind: input, shape index: {}]
  %s6 = inlined_call_operand.vmem [shape: f32[1,128], index: 6, kind: input, shape index: {}]
  %s7 = inlined_call_operand.hbm [shape: bf16[128,128], index: 7, kind: input, shape index: {}]
  %s8 = inlined_call_operand.vmem [shape: f32[1,128], index: 8, kind: input, shape index: {}]
  %s9 = inlined_call_operand.hbm [shape: f32[16,128], index: 9, kind: output, shape index: {0}]
  %s10 = inlined_call_operand.hbm [shape: f32[16,128], index: 10, kind: output, shape index: {1}]
  %11 = xla_tuple %s9, %s10
  %s12 = sld [smem:[#allocation0]]
  $region74: #{tpu_custom_call.1} parent=0
    _
  %s14 = ssub.s32 1, %s12
  %s15 = scalar_select 0, %s14, %s12
  $region1: #{tpu_custom_call.1} parent=0
    #allocation2 [shape = 'u8[8192]{0}', space=vmem, size = 0x2000, scoped, tag = 'input window, operand 0, single buffered']
    #allocation3 [shape = 's32[1]{0}', space=sflag, size = 0x4, scoped, tag = 'scoped memory for tpu_custom_call.1']
    #allocation4 [shape = 's32[1]{0}', space=sflag, size = 0x4, scoped, tag = 'scoped memory for tpu_custom_call.1']
    #allocation5 [shape = 'u8[32768]{0}', space=vmem, size = 0x8000, scoped, tag = 'input window, operand 1, single buffered']
    #allocation6 [shape = 's32[1]{0}', space=sflag, size = 0x4, scoped, tag = 'scoped memory for tpu_custom_call.1']
    #allocation7 [shape = 'u8[32768]{0}', space=vmem, size = 0x8000, scoped, tag = 'input window, operand 3, single buffered']
    #allocation8 [shape = 'u8[32768]{0}', space=vmem, size = 0x8000, scoped, tag = 'input window, operand 5, single buffered']
    #allocation9 [shape = 's32[1]{0}', space=sflag, size = 0x4, scoped, tag = 'scoped memory for tpu_custom_call.1']
    #allocation10 [shape = 'u8[32768]{0}', space=vmem, size = 0x8000, scoped, tag = 'input window, operand 7, single buffered']
    #allocation11 [shape = 'u8[8192]{0}', space=vmem, size = 0x2000, scoped, tag = 'output window, operand 0, single buffered']
    #allocation12 [shape = 'u8[8192]{0}', space=vmem, size = 0x2000, scoped, tag = 'output window, operand 1, single buffered']
    #allocation13 [shape = 's32[1]{0}', space=sflag, size = 0x4, scoped, tag = 'scoped memory for tpu_custom_call.1']
    %16 = vsyncpa [#allocation3], 0
    %17 = vsyncpa [#allocation6], 0
    %18 = vsyncpa [#allocation9], 0
    %19 = vsyncpa [#allocation4], 0
    %20 = vsyncpa [#allocation13], 0
    // Predicated region
    $region2: #{tpu_custom_call.1} parent=1 // pred_check
      _
    $region3: #{tpu_custom_call.1} parent=1 // pred_check_branch
      %22 = sbr.rel (0) target = $region5
    $region4: #{tpu_custom_call.1} parent=1 // pred_region
      %s24 = ssub.s32 256, 256
      %25 = vsyncadd [#allocation3], %s24
      %s26 = sshll.u32 [#allocation2], 4
      %s27 = int_to_ptr.vmem [resolvable:$true] %s26
      %32 = dma.hbm_to_vmem [thread:$0]  %s0, 256, %s27, [#allocation3], 128, 128, 8
    $region5: #{tpu_custom_call.1} parent=1 // pred_fallthru
      _
    // Predicated region
    $region6: #{tpu_custom_call.1} parent=1 // pred_check
      _
    $region7: #{tpu_custom_call.1} parent=1 // pred_check_branch
      %34 = sbr.rel (0) target = $region9
    $region8: #{tpu_custom_call.1} parent=1 // pred_region
      %s36 = ssub.s32 1024, 1024
      %37 = vsyncadd [#allocation6], %s36
      %s38 = sshll.u32 [#allocation5], 4
      %s39 = int_to_ptr.vmem [resolvable:$true] %s38
      %44 = dma.hbm_to_vmem [thread:$0]  %s1, 1024, %s39, [#allocation6], 64, 64, 4
    $region9: #{tpu_custom_call.1} parent=1 // pred_fallthru
      _
    // Predicated region
    $region10: #{tpu_custom_call.1} parent=1 // pred_check
      _
    $region11: #{tpu_custom_call.1} parent=1 // pred_check_branch
      %46 = sbr.rel (0) target = $region13
    $region12: #{tpu_custom_call.1} parent=1 // pred_region
      _
    $region13: #{tpu_custom_call.1} parent=1 // pred_fallthru
      _
    // Predicated region
    $region14: #{tpu_custom_call.1} parent=1 // pred_check
      _
    $region15: #{tpu_custom_call.1} parent=1 // pred_check_branch
      %48 = sbr.rel (0) target = $region17
    $region16: #{tpu_custom_call.1} parent=1 // pred_region
      %s50 = ssub.s32 1024, 1024
      %51 = vsyncadd [#allocation6], %s50
      %s52 = sshll.u32 [#allocation7], 4
      %s53 = int_to_ptr.vmem [resolvable:$true] %s52
      %58 = dma.hbm_to_vmem [thread:$0]  %s3, 1024, %s53, [#allocation6], 64, 64, 4
    $region17: #{tpu_custom_call.1} parent=1 // pred_fallthru
      _
    // Predicated region
    $region18: #{tpu_custom_call.1} parent=1 // pred_check
      _
    $region19: #{tpu_custom_call.1} parent=1 // pred_check_branch
      %60 = sbr.rel (0) target = $region21
    $region20: #{tpu_custom_call.1} parent=1 // pred_region
      _
    $region21: #{tpu_custom_call.1} parent=1 // pred_fallthru
      _
    // Predicated region
    $region22: #{tpu_custom_call.1} parent=1 // pred_check
      _
    $region23: #{tpu_custom_call.1} parent=1 // pred_check_branch
      %62 = sbr.rel (0) target = $region25
    $region24: #{tpu_custom_call.1} parent=1 // pred_region
      %s64 = ssub.s32 1024, 1024
      %65 = vsyncadd [#allocation9], %s64
      %s66 = sshll.u32 [#allocation8], 4
      %s67 = int_to_ptr.vmem [resolvable:$true] %s66
      %72 = dma.hbm_to_vmem [thread:$0]  %s5, 1024, %s67, [#allocation9], 64, 64, 4
    $region25: #{tpu_custom_call.1} parent=1 // pred_fallthru
      _
    // Predicated region
    $region26: #{tpu_custom_call.1} parent=1 // pred_check
      _
    $region27: #{tpu_custom_call.1} parent=1 // pred_check_branch
      %74 = sbr.rel (0) target = $region29
    $region28: #{tpu_custom_call.1} parent=1 // pred_region
      _
    $region29: #{tpu_custom_call.1} parent=1 // pred_fallthru
      _
    // Predicated region
    $region30: #{tpu_custom_call.1} parent=1 // pred_check
      _
    $region31: #{tpu_custom_call.1} parent=1 // pred_check_branch
      %76 = sbr.rel (0) target = $region33
    $region32: #{tpu_custom_call.1} parent=1 // pred_region
      %s78 = ssub.s32 1024, 1024
      %79 = vsyncadd [#allocation9], %s78
      %s80 = sshll.u32 [#allocation10], 4
      %s81 = int_to_ptr.vmem [resolvable:$true] %s80
      %86 = dma.hbm_to_vmem [thread:$0]  %s7, 1024, %s81, [#allocation9], 64, 64, 4
    $region33: #{tpu_custom_call.1} parent=1 // pred_fallthru
      _
    // Predicated region
    $region34: #{tpu_custom_call.1} parent=1 // pred_check
      _
    $region35: #{tpu_custom_call.1} parent=1 // pred_check_branch
      %88 = sbr.rel (0) target = $region37
    $region36: #{tpu_custom_call.1} parent=1 // pred_region
      _
    $region37: #{tpu_custom_call.1} parent=1 // pred_fallthru
      _
    // Predicated region
    $region38: #{tpu_custom_call.1} parent=1 // pred_check
      _
    $region39: #{tpu_custom_call.1} parent=1 // pred_check_branch
      %90 = sbr.rel (0) target = $region41
    $region40: #{tpu_custom_call.1} parent=1 // pred_region
      %91 = dma.done [#allocation3], 256
    $region41: #{tpu_custom_call.1} parent=1 // pred_fallthru
      _
    // Predicated region
    $region42: #{tpu_custom_call.1} parent=1 // pred_check
      _
    $region43: #{tpu_custom_call.1} parent=1 // pred_check_branch
      %93 = sbr.rel (0) target = $region45
    $region44: #{tpu_custom_call.1} parent=1 // pred_region
      %94 = dma.done [#allocation6], 1024
    $region45: #{tpu_custom_call.1} parent=1 // pred_fallthru
      _
    // Predicated region
    $region46: #{tpu_custom_call.1} parent=1 // pred_check
      _
    $region47: #{tpu_custom_call.1} parent=1 // pred_check_branch
      %96 = sbr.rel (0) target = $region49
    $region48: #{tpu_custom_call.1} parent=1 // pred_region
      %97 = dma.done [#allocation6], 1024
    $region49: #{tpu_custom_call.1} parent=1 // pred_fallthru
      _
    // Predicated region
    $region50: #{tpu_custom_call.1} parent=1 // pred_check
      _
    $region51: #{tpu_custom_call.1} parent=1 // pred_check_branch
      %99 = sbr.rel (0) target = $region53
    $region52: #{tpu_custom_call.1} parent=1 // pred_region
      %100 = dma.done [#allocation9], 1024
    $region53: #{tpu_custom_call.1} parent=1 // pred_fallthru
      _
    // Predicated region
    $region54: #{tpu_custom_call.1} parent=1 // pred_check
      _
    $region55: #{tpu_custom_call.1} parent=1 // pred_check_branch
      %102 = sbr.rel (0) target = $region57
    $region56: #{tpu_custom_call.1} parent=1 // pred_region
      %103 = dma.done [#allocation9], 1024
    $region57: #{tpu_custom_call.1} parent=1 // pred_fallthru
      _
    %v105 = vld [vmem:[#allocation2] sm:$0xff]
    %v106 = vld [vmem:[#allocation2 + $0x8] sm:$0xff]
    %v107 = vpack.c.bf16 %v106, %v105
    %v108 = vld [vmem:[#allocation5] sm:$0xf]
    %v109 = vld [vmem:[#allocation5 + $0x4] sm:$0xf]
    %v110 = vld [vmem:[#allocation5 + $0x8] sm:$0xf]
    %v111 = vld [vmem:[#allocation5 + $0xc] sm:$0xf]
    %v112 = vld [vmem:[#allocation5 + $0x10] sm:$0xf]
    %v113 = vld [vmem:[#allocation5 + $0x14] sm:$0xf]
    %v114 = vld [vmem:[#allocation5 + $0x18] sm:$0xf]
    %v115 = vld [vmem:[#allocation5 + $0x1c] sm:$0xf]
    %v116 = vld [vmem:[#allocation5 + $0x20] sm:$0xf]
    %v117 = vld [vmem:[#allocation5 + $0x24] sm:$0xf]
    %v118 = vld [vmem:[#allocation5 + $0x28] sm:$0xf]
    %v119 = vld [vmem:[#allocation5 + $0x2c] sm:$0xf]
    %v120 = vld [vmem:[#allocation5 + $0x30] sm:$0xf]
    %v121 = vld [vmem:[#allocation5 + $0x34] sm:$0xf]
    %v122 = vld [vmem:[#allocation5 + $0x38] sm:$0xf]
    %v123 = vld [vmem:[#allocation5 + $0x3c] sm:$0xf]
    %v124 = vld [vmem:[%s2] sm:$0x1]
    %v126 = vlaneseq
    %v127 = vshrl.u32 %v126, 7
    %v128 = vsub.s32 0, %v127
    %v129 = vrot.slane %v124, %v128
    %v147 = vunpack.c.l.b16 %v108
    %v148 = vunpack.c.l.b16 %v109
    %v149 = vunpack.c.l.b16 %v110
    %v150 = vunpack.c.l.b16 %v111
    %v151 = vunpack.c.l.b16 %v112
    %v152 = vunpack.c.l.b16 %v113
    %v153 = vunpack.c.l.b16 %v114
    %v154 = vunpack.c.l.b16 %v115
    %v155 = vunpack.c.l.b16 %v116
    %v156 = vunpack.c.l.b16 %v117
    %v157 = vunpack.c.l.b16 %v118
    %v158 = vunpack.c.l.b16 %v119
    %v159 = vunpack.c.l.b16 %v120
    %v160 = vunpack.c.l.b16 %v121
    %v161 = vunpack.c.l.b16 %v122
    %v162 = vunpack.c.l.b16 %v123
    %v163 = vpack.c.b16 %v148, %v147
    %v164 = vpack.c.b16 %v150, %v149
    %v165 = vpack.c.b16 %v152, %v151
    %v166 = vpack.c.b16 %v154, %v153
    %v167 = vpack.c.b16 %v156, %v155
    %v168 = vpack.c.b16 %v158, %v157
    %v169 = vpack.c.b16 %v160, %v159
    %v170 = vpack.c.b16 %v162, %v161
    %179 = vmatprep.subr.bf16.mxu0 0
    %180 = vmatpush1.bf16.msra.mxu0 %v163
    %181 = vmatprep.subr.bf16.mxu0 0
    %182 = vmatpush1.bf16.msra.mxu0 %v164
    %183 = vmatprep.subr.bf16.mxu0 0
    %184 = vmatpush1.bf16.msra.mxu0 %v165
    %185 = vmatprep.subr.bf16.mxu0 0
    %186 = vmatpush1.bf16.msra.mxu0 %v166
    %187 = vmatprep.subr.bf16.mxu0 0
    %188 = vmatpush1.bf16.msra.mxu0 %v167
    %189 = vmatprep.subr.bf16.mxu0 0
    %190 = vmatpush1.bf16.msra.mxu0 %v168
    %191 = vmatprep.subr.bf16.mxu0 0
    %192 = vmatpush1.bf16.msra.mxu0 %v169
    %193 = vmatprep.subr.bf16.mxu0 0
    %194 = vmatpush1.bf16.msra.mxu0 %v170
    %195 = vmatprep.subr.bf16.mxu0 0
    %196 = vmatpush1.bf16.msra.mxu0 0
    %197 = vmatprep.subr.bf16.mxu0 0
    %198 = vmatpush1.bf16.msra.mxu0 0
    %199 = vmatprep.subr.bf16.mxu0 0
    %200 = vmatpush1.bf16.msra.mxu0 0
    %201 = vmatprep.subr.bf16.mxu0 0
    %202 = vmatpush1.bf16.msra.mxu0 0
    %203 = vmatprep.subr.bf16.mxu0 0
    %204 = vmatpush1.bf16.msra.mxu0 0
    %205 = vmatprep.subr.bf16.mxu0 0
    %206 = vmatpush1.bf16.msra.mxu0 0
    %207 = vmatprep.subr.bf16.mxu0 0
    %208 = vmatpush1.bf16.msra.mxu0 0
    %209 = vmatprep.subr.bf16.mxu0 0
    %210 = vmatpush1.bf16.msra.mxu0 0
    %211 = vmatprep.mubr.bf16.mxu0 0
    %212 = vmatmul.mubr.bf16.gmra.mrb[0].mxu0 %v107
    %v213 = vpop.f32.mrb[0].mxu0
    %v214 = vadd.f32 %v129, %v213
    %v215 = vpop.f32.mrb[0].mxu0
    %v216 = vpop.f32.mrb[0].mxu0
    %v217 = vadd.f32 %v129, %v216
    %v218 = vpop.f32.mrb[0].mxu0
    %219 = vdwg.mxu0
    %v220 = vmax.f32 %v214, 0.0
    %v221 = vmax.f32 %v217, 0.0
    %v222 = vpack.c.bf16 %v221, %v220
    %v223 = vld [vmem:[#allocation7] sm:$0xf]
    %v224 = vld [vmem:[#allocation7 + $0x4] sm:$0xf]
    %v225 = vld [vmem:[#allocation7 + $0x8] sm:$0xf]
    %v226 = vld [vmem:[#allocation7 + $0xc] sm:$0xf]
    %v227 = vld [vmem:[#allocation7 + $0x10] sm:$0xf]
    %v228 = vld [vmem:[#allocation7 + $0x14] sm:$0xf]
    %v229 = vld [vmem:[#allocation7 + $0x18] sm:$0xf]
    %v230 = vld [vmem:[#allocation7 + $0x1c] sm:$0xf]
    %v231 = vld [vmem:[#allocation7 + $0x20] sm:$0xf]
    %v232 = vld [vmem:[#allocation7 + $0x24] sm:$0xf]
    %v233 = vld [vmem:[#allocation7 + $0x28] sm:$0xf]
    %v234 = vld [vmem:[#allocation7 + $0x2c] sm:$0xf]
    %v235 = vld [vmem:[#allocation7 + $0x30] sm:$0xf]
    %v236 = vld [vmem:[#allocation7 + $0x34] sm:$0xf]
    %v237 = vld [vmem:[#allocation7 + $0x38] sm:$0xf]
    %v238 = vld [vmem:[#allocation7 + $0x3c] sm:$0xf]
    %v239 = vld [vmem:[%s4] sm:$0x1]
    %v241 = vlaneseq
    %v242 = vshrl.u32 %v241, 7
    %v243 = vsub.s32 0, %v242
    %v244 = vrot.slane %v239, %v243
    %v262 = vunpack.c.l.b16 %v223
    %v263 = vunpack.c.l.b16 %v224
    %v264 = vunpack.c.l.b16 %v225
    %v265 = vunpack.c.l.b16 %v226
    %v266 = vunpack.c.l.b16 %v227
    %v267 = vunpack.c.l.b16 %v228
    %v268 = vunpack.c.l.b16 %v229
    %v269 = vunpack.c.l.b16 %v230
    %v270 = vunpack.c.l.b16 %v231
    %v271 = vunpack.c.l.b16 %v232
    %v272 = vunpack.c.l.b16 %v233
    %v273 = vunpack.c.l.b16 %v234
    %v274 = vunpack.c.l.b16 %v235
    %v275 = vunpack.c.l.b16 %v236
    %v276 = vunpack.c.l.b16 %v237
    %v277 = vunpack.c.l.b16 %v238
    %v278 = vpack.c.b16 %v263, %v262
    %v279 = vpack.c.b16 %v265, %v264
    %v280 = vpack.c.b16 %v267, %v266
    %v281 = vpack.c.b16 %v269, %v268
    %v282 = vpack.c.b16 %v271, %v270
    %v283 = vpack.c.b16 %v273, %v272
    %v284 = vpack.c.b16 %v275, %v274
    %v285 = vpack.c.b16 %v277, %v276
    %294 = vmatprep.subr.bf16.mxu0 0
    %295 = vmatpush1.bf16.msra.mxu0 %v278
    %296 = vmatprep.subr.bf16.mxu0 0
    %297 = vmatpush1.bf16.msra.mxu0 %v279
    %298 = vmatprep.subr.bf16.mxu0 0
    %299 = vmatpush1.bf16.msra.mxu0 %v280
    %300 = vmatprep.subr.bf16.mxu0 0
    %301 = vmatpush1.bf16.msra.mxu0 %v281
    %302 = vmatprep.subr.bf16.mxu0 0
    %303 = vmatpush1.bf16.msra.mxu0 %v282
    %304 = vmatprep.subr.bf16.mxu0 0
    %305 = vmatpush1.bf16.msra.mxu0 %v283
    %306 = vmatprep.subr.bf16.mxu0 0
    %307 = vmatpush1.bf16.msra.mxu0 %v284
    %308 = vmatprep.subr.bf16.mxu0 0
    %309 = vmatpush1.bf16.msra.mxu0 %v285
    %310 = vmatprep.subr.bf16.mxu0 0
    %311 = vmatpush1.bf16.msra.mxu0 0
    %312 = vmatprep.subr.bf16.mxu0 0
    %313 = vmatpush1.bf16.msra.mxu0 0
    %314 = vmatprep.subr.bf16.mxu0 0
    %315 = vmatpush1.bf16.msra.mxu0 0
    %316 = vmatprep.subr.bf16.mxu0 0
    %317 = vmatpush1.bf16.msra.mxu0 0
    %318 = vmatprep.subr.bf16.mxu0 0
    %319 = vmatpush1.bf16.msra.mxu0 0
    %320 = vmatprep.subr.bf16.mxu0 0
    %321 = vmatpush1.bf16.msra.mxu0 0
    %322 = vmatprep.subr.bf16.mxu0 0
    %323 = vmatpush1.bf16.msra.mxu0 0
    %324 = vmatprep.subr.bf16.mxu0 0
    %325 = vmatpush1.bf16.msra.mxu0 0
    %326 = vmatprep.mubr.bf16.mxu0 0
    %327 = vmatmul.mubr.bf16.gmra.mrb[0].mxu0 %v222
    %v328 = vpop.f32.mrb[0].mxu0
    %v329 = vadd.f32 %v244, %v328
    %v330 = vpop.f32.mrb[0].mxu0
    %v331 = vpop.f32.mrb[0].mxu0
    %v332 = vadd.f32 %v244, %v331
    %v333 = vpop.f32.mrb[0].mxu0
    %334 = vdwg.mxu0
    %335 = vst [vmem:[#allocation11] sm:$0xff] %v329
    %336 = vst [vmem:[#allocation11 + $0x8] sm:$0xff] %v332
    %v337 = vld [vmem:[#allocation8] sm:$0xf]
    %v338 = vld [vmem:[#allocation8 + $0x4] sm:$0xf]
    %v339 = vld [vmem:[#allocation8 + $0x8] sm:$0xf]
    %v340 = vld [vmem:[#allocation8 + $0xc] sm:$0xf]
    %v341 = vld [vmem:[#allocation8 + $0x10] sm:$0xf]
    %v342 = vld [vmem:[#allocation8 + $0x14] sm:$0xf]
    %v343 = vld [vmem:[#allocation8 + $0x18] sm:$0xf]
    %v344 = vld [vmem:[#allocation8 + $0x1c] sm:$0xf]
    %v345 = vld [vmem:[#allocation8 + $0x20] sm:$0xf]
    %v346 = vld [vmem:[#allocation8 + $0x24] sm:$0xf]
    %v347 = vld [vmem:[#allocation8 + $0x28] sm:$0xf]
    %v348 = vld [vmem:[#allocation8 + $0x2c] sm:$0xf]
    %v349 = vld [vmem:[#allocation8 + $0x30] sm:$0xf]
    %v350 = vld [vmem:[#allocation8 + $0x34] sm:$0xf]
    %v351 = vld [vmem:[#allocation8 + $0x38] sm:$0xf]
    %v352 = vld [vmem:[#allocation8 + $0x3c] sm:$0xf]
    %v353 = vld [vmem:[%s6] sm:$0x1]
    %v355 = vlaneseq
    %v356 = vshrl.u32 %v355, 7
    %v357 = vsub.s32 0, %v356
    %v358 = vrot.slane %v353, %v357
    %v376 = vunpack.c.l.b16 %v337
    %v377 = vunpack.c.l.b16 %v338
    %v378 = vunpack.c.l.b16 %v339
    %v379 = vunpack.c.l.b16 %v340
    %v380 = vunpack.c.l.b16 %v341
    %v381 = vunpack.c.l.b16 %v342
    %v382 = vunpack.c.l.b16 %v343
    %v383 = vunpack.c.l.b16 %v344
    %v384 = vunpack.c.l.b16 %v345
    %v385 = vunpack.c.l.b16 %v346
    %v386 = vunpack.c.l.b16 %v347
    %v387 = vunpack.c.l.b16 %v348
    %v388 = vunpack.c.l.b16 %v349
    %v389 = vunpack.c.l.b16 %v350
    %v390 = vunpack.c.l.b16 %v351
    %v391 = vunpack.c.l.b16 %v352
    %v392 = vpack.c.b16 %v377, %v376
    %v393 = vpack.c.b16 %v379, %v378
    %v394 = vpack.c.b16 %v381, %v380
    %v395 = vpack.c.b16 %v383, %v382
    %v396 = vpack.c.b16 %v385, %v384
    %v397 = vpack.c.b16 %v387, %v386
    %v398 = vpack.c.b16 %v389, %v388
    %v399 = vpack.c.b16 %v391, %v390
    %408 = vmatprep.subr.bf16.mxu0 0
    %409 = vmatpush1.bf16.msra.mxu0 %v392
    %410 = vmatprep.subr.bf16.mxu0 0
    %411 = vmatpush1.bf16.msra.mxu0 %v393
    %412 = vmatprep.subr.bf16.mxu0 0
    %413 = vmatpush1.bf16.msra.mxu0 %v394
    %414 = vmatprep.subr.bf16.mxu0 0
    %415 = vmatpush1.bf16.msra.mxu0 %v395
    %416 = vmatprep.subr.bf16.mxu0 0
    %417 = vmatpush1.bf16.msra.mxu0 %v396
    %418 = vmatprep.subr.bf16.mxu0 0
    %419 = vmatpush1.bf16.msra.mxu0 %v397
    %420 = vmatprep.subr.bf16.mxu0 0
    %421 = vmatpush1.bf16.msra.mxu0 %v398
    %422 = vmatprep.subr.bf16.mxu0 0
    %423 = vmatpush1.bf16.msra.mxu0 %v399
    %424 = vmatprep.subr.bf16.mxu0 0
    %425 = vmatpush1.bf16.msra.mxu0 0
    %426 = vmatprep.subr.bf16.mxu0 0
    %427 = vmatpush1.bf16.msra.mxu0 0
    %428 = vmatprep.subr.bf16.mxu0 0
    %429 = vmatpush1.bf16.msra.mxu0 0
    %430 = vmatprep.subr.bf16.mxu0 0
    %431 = vmatpush1.bf16.msra.mxu0 0
    %432 = vmatprep.subr.bf16.mxu0 0
    %433 = vmatpush1.bf16.msra.mxu0 0
    %434 = vmatprep.subr.bf16.mxu0 0
    %435 = vmatpush1.bf16.msra.mxu0 0
    %436 = vmatprep.subr.bf16.mxu0 0
    %437 = vmatpush1.bf16.msra.mxu0 0
    %438 = vmatprep.subr.bf16.mxu0 0
    %439 = vmatpush1.bf16.msra.mxu0 0
    %440 = vmatprep.mubr.bf16.mxu0 0
    %441 = vmatmul.mubr.bf16.gmra.mrb[0].mxu0 %v107
    %v442 = vpop.f32.mrb[0].mxu0
    %v443 = vadd.f32 %v358, %v442
    %v444 = vpop.f32.mrb[0].mxu0
    %v445 = vpop.f32.mrb[0].mxu0
    %v446 = vadd.f32 %v358, %v445
    %v447 = vpop.f32.mrb[0].mxu0
    %448 = vdwg.mxu0
    %v449 = vmax.f32 %v443, 0.0
    %v450 = vmax.f32 %v446, 0.0
    %v451 = vpack.c.bf16 %v450, %v449
    %v452 = vld [vmem:[#allocation10] sm:$0xf]
    %v453 = vld [vmem:[#allocation10 + $0x4] sm:$0xf]
    %v454 = vld [vmem:[#allocation10 + $0x8] sm:$0xf]
    %v455 = vld [vmem:[#allocation10 + $0xc] sm:$0xf]
    %v456 = vld [vmem:[#allocation10 + $0x10] sm:$0xf]
    %v457 = vld [vmem:[#allocation10 + $0x14] sm:$0xf]
    %v458 = vld [vmem:[#allocation10 + $0x18] sm:$0xf]
    %v459 = vld [vmem:[#allocation10 + $0x1c] sm:$0xf]
    %v460 = vld [vmem:[#allocation10 + $0x20] sm:$0xf]
    %v461 = vld [vmem:[#allocation10 + $0x24] sm:$0xf]
    %v462 = vld [vmem:[#allocation10 + $0x28] sm:$0xf]
    %v463 = vld [vmem:[#allocation10 + $0x2c] sm:$0xf]
    %v464 = vld [vmem:[#allocation10 + $0x30] sm:$0xf]
    %v465 = vld [vmem:[#allocation10 + $0x34] sm:$0xf]
    %v466 = vld [vmem:[#allocation10 + $0x38] sm:$0xf]
    %v467 = vld [vmem:[#allocation10 + $0x3c] sm:$0xf]
    %v468 = vld [vmem:[%s8] sm:$0x1]
    %v470 = vlaneseq
    %v471 = vshrl.u32 %v470, 7
    %v472 = vsub.s32 0, %v471
    %v473 = vrot.slane %v468, %v472
    %v491 = vunpack.c.l.b16 %v452
    %v492 = vunpack.c.l.b16 %v453
    %v493 = vunpack.c.l.b16 %v454
    %v494 = vunpack.c.l.b16 %v455
    %v495 = vunpack.c.l.b16 %v456
    %v496 = vunpack.c.l.b16 %v457
    %v497 = vunpack.c.l.b16 %v458
    %v498 = vunpack.c.l.b16 %v459
    %v499 = vunpack.c.l.b16 %v460
    %v500 = vunpack.c.l.b16 %v461
    %v501 = vunpack.c.l.b16 %v462
    %v502 = vunpack.c.l.b16 %v463
    %v503 = vunpack.c.l.b16 %v464
    %v504 = vunpack.c.l.b16 %v465
    %v505 = vunpack.c.l.b16 %v466
    %v506 = vunpack.c.l.b16 %v467
    %v507 = vpack.c.b16 %v492, %v491
    %v508 = vpack.c.b16 %v494, %v493
    %v509 = vpack.c.b16 %v496, %v495
    %v510 = vpack.c.b16 %v498, %v497
    %v511 = vpack.c.b16 %v500, %v499
    %v512 = vpack.c.b16 %v502, %v501
    %v513 = vpack.c.b16 %v504, %v503
    %v514 = vpack.c.b16 %v506, %v505
    %523 = vmatprep.subr.bf16.mxu0 0
    %524 = vmatpush1.bf16.msra.mxu0 %v507
    %525 = vmatprep.subr.bf16.mxu0 0
    %526 = vmatpush1.bf16.msra.mxu0 %v508
    %527 = vmatprep.subr.bf16.mxu0 0
    %528 = vmatpush1.bf16.msra.mxu0 %v509
    %529 = vmatprep.subr.bf16.mxu0 0
    %530 = vmatpush1.bf16.msra.mxu0 %v510
    %531 = vmatprep.subr.bf16.mxu0 0
    %532 = vmatpush1.bf16.msra.mxu0 %v511
    %533 = vmatprep.subr.bf16.mxu0 0
    %534 = vmatpush1.bf16.msra.mxu0 %v512
    %535 = vmatprep.subr.bf16.mxu0 0
    %536 = vmatpush1.bf16.msra.mxu0 %v513
    %537 = vmatprep.subr.bf16.mxu0 0
    %538 = vmatpush1.bf16.msra.mxu0 %v514
    %539 = vmatprep.subr.bf16.mxu0 0
    %540 = vmatpush1.bf16.msra.mxu0 0
    %541 = vmatprep.subr.bf16.mxu0 0
    %542 = vmatpush1.bf16.msra.mxu0 0
    %543 = vmatprep.subr.bf16.mxu0 0
    %544 = vmatpush1.bf16.msra.mxu0 0
    %545 = vmatprep.subr.bf16.mxu0 0
    %546 = vmatpush1.bf16.msra.mxu0 0
    %547 = vmatprep.subr.bf16.mxu0 0
    %548 = vmatpush1.bf16.msra.mxu0 0
    %549 = vmatprep.subr.bf16.mxu0 0
    %550 = vmatpush1.bf16.msra.mxu0 0
    %551 = vmatprep.subr.bf16.mxu0 0
    %552 = vmatpush1.bf16.msra.mxu0 0
    %553 = vmatprep.subr.bf16.mxu0 0
    %554 = vmatpush1.bf16.msra.mxu0 0
    %555 = vmatprep.mubr.bf16.mxu0 0
    %556 = vmatmul.mubr.bf16.gmra.mrb[0].mxu0 %v451
    %v557 = vpop.f32.mrb[0].mxu0
    %v558 = vadd.f32 %v473, %v557
    %v559 = vpop.f32.mrb[0].mxu0
    %v560 = vpop.f32.mrb[0].mxu0
    %v561 = vadd.f32 %v473, %v560
    %v562 = vpop.f32.mrb[0].mxu0
    %563 = vdwg.mxu0
    %564 = vst [vmem:[#allocation12] sm:$0xff] %v558
    %565 = vst [vmem:[#allocation12 + $0x8] sm:$0xff] %v561
    // Predicated region
    $region58: #{tpu_custom_call.1} parent=1 // pred_check
      _
    $region59: #{tpu_custom_call.1} parent=1 // pred_check_branch
      %567 = sbr.rel (0) target = $region61
    $region60: #{tpu_custom_call.1} parent=1 // pred_region
      %s569 = ssub.s32 256, 256
      %570 = vsyncadd [#allocation4], %s569
      %s571 = sshll.u32 [#allocation11], 4
      %s572 = int_to_ptr.vmem [resolvable:$true] %s571
      %577 = dma.vmem_to_hbm [thread:$0]  %s572, 256, %s9, [#allocation4], 128, 128, 8
    $region61: #{tpu_custom_call.1} parent=1 // pred_fallthru
      _
    // Predicated region
    $region62: #{tpu_custom_call.1} parent=1 // pred_check
      _
    $region63: #{tpu_custom_call.1} parent=1 // pred_check_branch
      %579 = sbr.rel (0) target = $region65
    $region64: #{tpu_custom_call.1} parent=1 // pred_region
      %s581 = ssub.s32 256, 256
      %582 = vsyncadd [#allocation13], %s581
      %s583 = sshll.u32 [#allocation12], 4
      %s584 = int_to_ptr.vmem [resolvable:$true] %s583
      %589 = dma.vmem_to_hbm [thread:$0]  %s584, 256, %s10, [#allocation13], 128, 128, 8
    $region65: #{tpu_custom_call.1} parent=1 // pred_fallthru
      _
    // Predicated region
    $region66: #{tpu_custom_call.1} parent=1 // pred_check
      _
    $region67: #{tpu_custom_call.1} parent=1 // pred_check_branch
      %591 = sbr.rel (0) target = $region69
    $region68: #{tpu_custom_call.1} parent=1 // pred_region
      %592 = dma.done [#allocation4], 256
    $region69: #{tpu_custom_call.1} parent=1 // pred_fallthru
      _
    // Predicated region
    $region70: #{tpu_custom_call.1} parent=1 // pred_check
      _
    $region71: #{tpu_custom_call.1} parent=1 // pred_check_branch
      %594 = sbr.rel (0) target = $region73
    $region72: #{tpu_custom_call.1} parent=1 // pred_region
      %595 = dma.done [#allocation13], 256
    $region73: #{tpu_custom_call.1} parent=1 // pred_fallthru
      _
    %596 = vsyncpa [#allocation3], 1
    %597 = vsyncpa [#allocation6], 1
    %598 = vsyncpa [#allocation9], 1
    %599 = vsyncpa [#allocation4], 1
    %600 = vsyncpa [#allocation13], 1

</llo_original>
